<compile_context>
chip_gen: v5e
topology: v5e:2x2
jax: 0.10.0
libtpu: 0.0.40
codegen_flags: <defaults>
</compile_context>

<pallas_src>
import jax
import jax.numpy as jnp
from jax import lax
from jax.experimental import pallas as pl
from jax.experimental.pallas import tpu as pltpu

_INV_SQRT2 = 0.7071067811865476


def _gelu_exact(x):
    # Exact GELU: 0.5 * x * (1 + erf(x / sqrt(2)))  (matches torch F.gelu default)
    return 0.5 * x * (1.0 + lax.erf(x * _INV_SQRT2))


def _mm_gelu_kernel_f32(a_ref, b_ref, o_ref):
    """f32 output: accumulate directly into the resident output block."""
    k = pl.program_id(2)

    @pl.when(k == 0)
    def _():
        o_ref[...] = jnp.zeros_like(o_ref)

    o_ref[...] += jnp.dot(
        a_ref[...], b_ref[...], preferred_element_type=jnp.float32
    )

    @pl.when(k == pl.num_programs(2) - 1)
    def _():
        o_ref[...] = _gelu_exact(o_ref[...])


def _mm_gelu_kernel_acc(a_ref, b_ref, o_ref, acc_ref):
    """Non-f32 output: keep a separate f32 accumulator scratch."""
    k = pl.program_id(2)

    @pl.when(k == 0)
    def _():
        acc_ref[...] = jnp.zeros_like(acc_ref)

    acc_ref[...] += jnp.dot(
        a_ref[...], b_ref[...], preferred_element_type=jnp.float32
    )

    @pl.when(k == pl.num_programs(2) - 1)
    def _():
        o_ref[...] = _gelu_exact(acc_ref[...]).astype(o_ref.dtype)


def _round_up(x, m):
    return ((x + m - 1) // m) * m


def _pick_tile(dim, preferred, align=128):
    # Largest of (dim rounded up to 128) and `preferred`, whichever is smaller:
    # big dims get 256/512-class tiles (MXU-friendly on v6e/v7x), small dims
    # stay at a single 128-aligned tile.
    return min(preferred, _round_up(dim, align))


def matmul_gelu(a, b, *, tm=None, tn=None, tk=None):
    """Computes gelu(a @ b) with a tiled Pallas TPU kernel.

    Tile sizes may be overridden per call site; defaults are sized for
    grid-overhead amortization and MXU occupancy, and shapes that do not
    tile evenly are zero-padded (zeros in K are exact; padded M/N rows and
    columns are sliced away).
    """
    M, K = a.shape
    K2, N = b.shape
    assert K == K2, "inner dims must match"

    out_dtype = a.dtype
    # NOTE: inputs are kept in their original dtype to match torch.mm
    # numerics; callers wanting max MXU throughput on v6e/v7x can cast
    # a/b to bfloat16 before calling (accumulation stays f32).

    tm = tm if tm is not None else _pick_tile(M, 256)
    tn = tn if tn is not None else _pick_tile(N, 512)
    tk = tk if tk is not None else _pick_tile(K, 512)

    Mp, Np, Kp = _round_up(M, tm), _round_up(N, tn), _round_up(K, tk)
    if (Mp, Kp) != (M, K):
        a = jnp.pad(a, ((0, Mp - M), (0, Kp - K)))
    if (Kp, Np) != (K, N):
        b = jnp.pad(b, ((0, Kp - K), (0, Np - N)))

    grid = (Mp // tm, Np // tn, Kp // tk)

    f32_out = jnp.dtype(out_dtype) == jnp.dtype(jnp.float32)
    kernel = _mm_gelu_kernel_f32 if f32_out else _mm_gelu_kernel_acc
    scratch_shapes = [] if f32_out else [pltpu.VMEM((tm, tn), jnp.float32)]

    itm_a = jnp.dtype(a.dtype).itemsize
    itm_b = jnp.dtype(b.dtype).itemsize
    itm_o = jnp.dtype(out_dtype).itemsize

    # VMEM budget: double-buffered A/B/O tiles (+ acc scratch if any), plus
    # headroom. Cap at 64 MiB so the limit is safe on v7x (64 MiB physical)
    # while still raising the 16/32 MiB scoped defaults when tiles are large.
    vmem_need = 2 * (tm * tk * itm_a + tk * tn * itm_b + tm * tn * itm_o)
    if not f32_out:
        vmem_need += tm * tn * 4
    vmem_limit = int(min(max(vmem_need + (8 << 20), 32 << 20), 64 << 20))

    cost = pl.CostEstimate(
        flops=2 * Mp * Np * Kp,
        transcendentals=Mp * Np,
        bytes_accessed=Mp * Kp * itm_a + Kp * Np * itm_b + Mp * Np * itm_o,
    )

    out = pl.pallas_call(
        kernel,
        out_shape=jax.ShapeDtypeStruct((Mp, Np), out_dtype),
        grid_spec=pltpu.PrefetchScalarGridSpec(
            num_scalar_prefetch=0,
            grid=grid,
            in_specs=[
                pl.BlockSpec((tm, tk), lambda i, j, k: (i, k)),
                pl.BlockSpec((tk, tn), lambda i, j, k: (k, j)),
            ],
            out_specs=pl.BlockSpec((tm, tn), lambda i, j, k: (i, j)),
            scratch_shapes=scratch_shapes,
        ),
        compiler_params=pltpu.CompilerParams(
            dimension_semantics=("parallel", "parallel", "arbitrary"),
            vmem_limit_bytes=vmem_limit,
        ),
        cost_estimate=cost,
    )(a, b)

    if (Mp, Np) != (M, N):
        out = out[:M, :N]
    return out


if __name__ == "__main__":
    key = jax.random.PRNGKey(0)

    # Case 1: small, evenly-tiled shapes consistent with torch.mm.
    M, K, N = 128, 256, 128
    ka, kb, kc, kd = jax.random.split(key, 4)
    a = jax.random.normal(ka, (M, K), dtype=jnp.float32)
    b = jax.random.normal(kb, (K, N), dtype=jnp.float32)

    out = matmul_gelu(a, b)
    jax.block_until_ready(out)
    ref = jax.nn.gelu(a @ b, approximate=False)
    assert out.shape == (M, N)
    assert jnp.allclose(out, ref, atol=2e-3, rtol=2e-3), "mismatch vs reference (even)"

    # Case 2: awkward (non-128-multiple) shapes to exercise the padding path.
    M2, K2, N2 = 200, 192, 160
    a2 = jax.random.normal(kc, (M2, K2), dtype=jnp.float32)
    b2 = jax.random.normal(kd, (K2, N2), dtype=jnp.float32)

    out2 = matmul_gelu(a2, b2)
    jax.block_until_ready(out2)
    ref2 = jax.nn.gelu(a2 @ b2, approximate=False)
    assert out2.shape == (M2, N2)
    assert jnp.allclose(out2, ref2, atol=2e-3, rtol=2e-3), "mismatch vs reference (padded)"

    print("KERNEL_OK")
</pallas_src>

<mosaic_0001>
module attributes {stable_mosaic.version = 11 : i64} {
  func.func @_mm_gelu_kernel_f32(%arg0: i32, %arg1: i32, %arg2: i32, %arg3: memref<128x256xf32, #tpu.memory_space<vmem>>, %arg4: memref<256x128xf32, #tpu.memory_space<vmem>>, %arg5: memref<128x128xf32, #tpu.memory_space<vmem>>) attributes {dimension_semantics = [#tpu.dimension_semantics<parallel>, #tpu.dimension_semantics<parallel>, #tpu.dimension_semantics<arbitrary>], iteration_bounds = array<i64: 1, 1, 1>, scalar_prefetch = 0 : i64, scratch_operands = 0 : i64, tpu.core_type = #tpu.core_type<tc>, window_params = [{transform_indices = @transform_0, window_bounds = array<i64: 128, 256>}, {transform_indices = @transform_1, window_bounds = array<i64: 256, 128>}, {transform_indices = @transform_2, window_bounds = array<i64: 128, 128>}]} {
    %c0_i32 = arith.constant 0 : i32
    %0 = arith.cmpi eq, %arg2, %c0_i32 : i32
    %1 = arith.extui %0 : i1 to i32
    %c0_i32_0 = arith.constant 0 : i32
    %2 = arith.cmpi ne, %1, %c0_i32_0 : i32
    scf.if %2 {
      %cst_10 = arith.constant 0.000000e+00 : f32
      %12 = vector.broadcast %cst_10 : f32 to vector<128x128xf32>
      %c0_11 = arith.constant 0 : index
      %c0_12 = arith.constant 0 : index
      %13 = vector.load %arg5[%c0_11, %c0_12] : memref<128x128xf32, #tpu.memory_space<vmem>>, vector<128x128xf32>
      tpu.vector_store %arg5[%c0_11, %c0_12], %12 {strides = array<i32>} : memref<128x128xf32, #tpu.memory_space<vmem>>, vector<128x128xf32>,
    } else {
    }
    %c0 = arith.constant 0 : index
    %c0_1 = arith.constant 0 : index
    %3 = vector.load %arg5[%c0, %c0_1] : memref<128x128xf32, #tpu.memory_space<vmem>>, vector<128x128xf32>
    %c0_2 = arith.constant 0 : index
    %c0_3 = arith.constant 0 : index
    %4 = vector.load %arg3[%c0_2, %c0_3] : memref<128x256xf32, #tpu.memory_space<vmem>>, vector<128x256xf32>
    %c0_4 = arith.constant 0 : index
    %c0_5 = arith.constant 0 : index
    %5 = vector.load %arg4[%c0_4, %c0_5] : memref<256x128xf32, #tpu.memory_space<vmem>>, vector<256x128xf32>
    %cst = arith.constant dense<0.000000e+00> : vector<128x128xf32>
    %6 = tpu.matmul %4, %5, %cst {dimension_numbers = #tpu.dot_dimension_numbers<[1], [0], [0], [1], [0, 0, 1, 1], [], []>} : vector<128x256xf32>, vector<256x128xf32>, vector<128x128xf32> -> vector<128x128xf32>
    %7 = arith.addf %3, %6 : vector<128x128xf32>
    %c0_6 = arith.constant 0 : index
    %c0_7 = arith.constant 0 : index
    %8 = vector.load %arg5[%c0_6, %c0_7] : memref<128x128xf32, #tpu.memory_space<vmem>>, vector<128x128xf32>
    tpu.vector_store %arg5[%c0_6, %c0_7], %7 {strides = array<i32>} : memref<128x128xf32, #tpu.memory_space<vmem>>, vector<128x128xf32>,
    %c0_i32_8 = arith.constant 0 : i32
    %9 = arith.cmpi eq, %arg2, %c0_i32_8 : i32
    %10 = arith.extui %9 : i1 to i32
    %c0_i32_9 = arith.constant 0 : i32
    %11 = arith.cmpi ne, %10, %c0_i32_9 : i32
    scf.if %11 {
      %c0_10 = arith.constant 0 : index
      %c0_11 = arith.constant 0 : index
      %12 = vector.load %arg5[%c0_10, %c0_11] : memref<128x128xf32, #tpu.memory_space<vmem>>, vector<128x128xf32>
      %cst_12 = arith.constant 5.000000e-01 : f32
      %13 = vector.broadcast %cst_12 : f32 to vector<128x128xf32>
      %14 = arith.mulf %13, %12 : vector<128x128xf32>
      %cst_13 = arith.constant 0.707106769 : f32
      %15 = vector.broadcast %cst_13 : f32 to vector<128x128xf32>
      %16 = arith.mulf %12, %15 : vector<128x128xf32>
      %17 = math.erf %16 : vector<128x128xf32>
      %cst_14 = arith.constant 1.000000e+00 : f32
      %18 = vector.broadcast %cst_14 : f32 to vector<128x128xf32>
      %19 = arith.addf %18, %17 : vector<128x128xf32>
      %20 = arith.mulf %14, %19 : vector<128x128xf32>
      %c0_15 = arith.constant 0 : index
      %c0_16 = arith.constant 0 : index
      %21 = vector.load %arg5[%c0_15, %c0_16] : memref<128x128xf32, #tpu.memory_space<vmem>>, vector<128x128xf32>
      tpu.vector_store %arg5[%c0_15, %c0_16], %20 {strides = array<i32>} : memref<128x128xf32, #tpu.memory_space<vmem>>, vector<128x128xf32>,
    } else {
    }
    return
  }
  func.func @transform_0(%arg0: i32, %arg1: i32, %arg2: i32) -> (i32, i32) {
    %c0_i32 = arith.constant 0 : i32
    return %arg0, %arg2 : i32, i32
  }
  func.func @transform_1(%arg0: i32, %arg1: i32, %arg2: i32) -> (i32, i32) {
    %c0_i32 = arith.constant 0 : i32
    return %arg2, %arg1 : i32, i32
  }
  func.func @transform_2(%arg0: i32, %arg1: i32, %arg2: i32) -> (i32, i32) {
    %c0_i32 = arith.constant 0 : i32
    return %arg0, %arg1 : i32, i32
  }
}

</mosaic_0001>

<llo_original>
// kernel: tpu_custom_call.1
$region0: #{tpu_custom_call.1}
  #allocation0 [shape = 'u32[]', space=smem, size = 0x4, offset = 0x4, fixed_abs, tag = 'smem constant byte address 0x4 - core index']
  #allocation1 [shape = 'u32[72,128]{1,0:T(1,128)}', space=vmem, size = 0x9000, scoped, tag = 'internal scratch']
  %s0 = inlined_call_operand.hbm [shape: f32[128,256], index: 0, kind: input, shape index: {}]
  %s1 = inlined_call_operand.hbm [shape: f32[256,128], index: 1, kind: input, shape index: {}]
  %s2 = inlined_call_operand.hbm [shape: f32[128,128], index: 2, kind: output, shape index: {}]
  %s3 = sld [smem:[#allocation0]]
  $region34: #{tpu_custom_call.1} parent=0
    _
  %s5 = ssub.s32 1, %s3
  %s6 = scalar_select 0, %s5, %s3
  $region1: #{tpu_custom_call.1} parent=0
    #allocation2 [shape = 'u8[131072]{0}', space=vmem, size = 0x20000, scoped, tag = 'input window, operand 0, single buffered']
    #allocation3 [shape = 's32[1]{0}', space=sflag, size = 0x4, scoped, tag = 'scoped memory for tpu_custom_call.1']
    #allocation4 [shape = 's32[1]{0}', space=sflag, size = 0x4, scoped, tag = 'scoped memory for tpu_custom_call.1']
    #allocation5 [shape = 'u8[131072]{0}', space=vmem, size = 0x20000, scoped, tag = 'input window, operand 1, single buffered']
    #allocation6 [shape = 's32[1]{0}', space=sflag, size = 0x4, scoped, tag = 'scoped memory for tpu_custom_call.1']
    #allocation7 [shape = 'u8[65536]{0}', space=vmem, size = 0x10000, scoped, tag = 'output window, operand 0, single buffered']
    %7 = vsyncpa [#allocation3], 0
    %8 = vsyncpa [#allocation6], 0
    %9 = vsyncpa [#allocation4], 0
    // Predicated region
    $region2: #{tpu_custom_call.1} parent=1 // pred_check
      _
    $region3: #{tpu_custom_call.1} parent=1 // pred_check_branch
      %11 = sbr.rel (0) target = $region5
    $region4: #{tpu_custom_call.1} parent=1 // pred_region
      %13 = vsyncadd [#allocation3], 0
      %s14 = sshll.u32 %s0, 4
      %s15 = int_to_ptr.hbm [resolvable:$true] %s14
      %s16 = sshll.u32 [#allocation2], 4
      %s17 = int_to_ptr.vmem [resolvable:$true] %s16
      %22 = dma.hbm_to_vmem [thread:$0]  %s15, 4096, %s17, [#allocation3], 256, 256, 16
    $region5: #{tpu_custom_call.1} parent=1 // pred_fallthru
      _
    // Predicated region
    $region6: #{tpu_custom_call.1} parent=1 // pred_check
      _
    $region7: #{tpu_custom_call.1} parent=1 // pred_check_branch
      %24 = sbr.rel (0) target = $region9
    $region8: #{tpu_custom_call.1} parent=1 // pred_region
      %26 = vsyncadd [#allocation6], 0
      %s27 = sshll.u32 %s1, 4
      %s28 = int_to_ptr.hbm [resolvable:$true] %s27
      %s29 = sshll.u32 [#allocation5], 4
      %s30 = int_to_ptr.vmem [resolvable:$true] %s29
      %35 = dma.hbm_to_vmem [thread:$0]  %s28, 4096, %s30, [#allocation6], 128, 128, 8
    $region9: #{tpu_custom_call.1} parent=1 // pred_fallthru
      _
    // Predicated region
    $region10: #{tpu_custom_call.1} parent=1 // pred_check
      _
    $region11: #{tpu_custom_call.1} parent=1 // pred_check_branch
      %37 = sbr.rel (0) target = $region13
    $region12: #{tpu_custom_call.1} parent=1 // pred_region
      %39 = dma.done [#allocation3], 4096
    $region13: #{tpu_custom_call.1} parent=1 // pred_fallthru
      _
    // Predicated region
    $region14: #{tpu_custom_call.1} parent=1 // pred_check
      _
    $region15: #{tpu_custom_call.1} parent=1 // pred_check_branch
      %41 = sbr.rel (0) target = $region17
    $region16: #{tpu_custom_call.1} parent=1 // pred_region
      %43 = dma.done [#allocation6], 4096
    $region17: #{tpu_custom_call.1} parent=1 // pred_fallthru
      _
    %p44 = scmp.eq.s32.totalorder 0, 0
    // Predicated region
    $region18: #{tpu_custom_call.1} parent=1 // pred_check
      %p45 = pneg %p44
    $region19: #{tpu_custom_call.1} parent=1 // pred_check_branch
      %47 = sbr.rel (%p45) target = $region21
    $region20: #{tpu_custom_call.1} parent=1 // pred_region
      %48 = vst [vmem:[#allocation7] sm:$0xff] 0.0
      %49 = vst [vmem:[#allocation7 + $0x8] sm:$0xff] 0.0
      %50 = vst [vmem:[#allocation7 + $0x10] sm:$0xff] 0.0
      %51 = vst [vmem:[#allocation7 + $0x18] sm:$0xff] 0.0
      %52 = vst [vmem:[#allocation7 + $0x20] sm:$0xff] 0.0
      %53 = vst [vmem:[#allocation7 + $0x28] sm:$0xff] 0.0
      %54 = vst [vmem:[#allocation7 + $0x30] sm:$0xff] 0.0
      %55 = vst [vmem:[#allocation7 + $0x38] sm:$0xff] 0.0
      %56 = vst [vmem:[#allocation7 + $0x40] sm:$0xff] 0.0
      %57 = vst [vmem:[#allocation7 + $0x48] sm:$0xff] 0.0
      %58 = vst [vmem:[#allocation7 + $0x50] sm:$0xff] 0.0
      %59 = vst [vmem:[#allocation7 + $0x58] sm:$0xff] 0.0
      %60 = vst [vmem:[#allocation7 + $0x60] sm:$0xff] 0.0
      %61 = vst [vmem:[#allocation7 + $0x68] sm:$0xff] 0.0
      %62 = vst [vmem:[#allocation7 + $0x70] sm:$0xff] 0.0
      %63 = vst [vmem:[#allocation7 + $0x78] sm:$0xff] 0.0
    $region21: #{tpu_custom_call.1} parent=1 // pred_fallthru
      _
    %v64 = vld [vmem:[#allocation7] sm:$0xff]
    %v65 = vld [vmem:[#allocation7 + $0x8] sm:$0xff]
    %v66 = vld [vmem:[#allocation7 + $0x10] sm:$0xff]
    %v67 = vld [vmem:[#allocation7 + $0x18] sm:$0xff]
    %v68 = vld [vmem:[#allocation7 + $0x20] sm:$0xff]
    %v69 = vld [vmem:[#allocation7 + $0x28] sm:$0xff]
    %v70 = vld [vmem:[#allocation7 + $0x30] sm:$0xff]
    %v71 = vld [vmem:[#allocation7 + $0x38] sm:$0xff]
    %v72 = vld [vmem:[#allocation7 + $0x40] sm:$0xff]
    %v73 = vld [vmem:[#allocation7 + $0x48] sm:$0xff]
    %v74 = vld [vmem:[#allocation7 + $0x50] sm:$0xff]
    %v75 = vld [vmem:[#allocation7 + $0x58] sm:$0xff]
    %v76 = vld [vmem:[#allocation7 + $0x60] sm:$0xff]
    %v77 = vld [vmem:[#allocation7 + $0x68] sm:$0xff]
    %v78 = vld [vmem:[#allocation7 + $0x70] sm:$0xff]
    %v79 = vld [vmem:[#allocation7 + $0x78] sm:$0xff]
    %v80 = vld [vmem:[#allocation2] sm:$0xff]
    %v81 = vld [vmem:[#allocation2 + $0x8] sm:$0xff]
    %v82 = vld [vmem:[#allocation2 + $0x10] sm:$0xff]
    %v83 = vld [vmem:[#allocation2 + $0x18] sm:$0xff]
    %v84 = vld [vmem:[#allocation2 + $0x20] sm:$0xff]
    %v85 = vld [vmem:[#allocation2 + $0x28] sm:$0xff]
    %v86 = vld [vmem:[#allocation2 + $0x30] sm:$0xff]
    %v87 = vld [vmem:[#allocation2 + $0x38] sm:$0xff]
    %v88 = vld [vmem:[#allocation2 + $0x40] sm:$0xff]
    %v89 = vld [vmem:[#allocation2 + $0x48] sm:$0xff]
    %v90 = vld [vmem:[#allocation2 + $0x50] sm:$0xff]
    %v91 = vld [vmem:[#allocation2 + $0x58] sm:$0xff]
    %v92 = vld [vmem:[#allocation2 + $0x60] sm:$0xff]
    %v93 = vld [vmem:[#allocation2 + $0x68] sm:$0xff]
    %v94 = vld [vmem:[#allocation2 + $0x70] sm:$0xff]
    %v95 = vld [vmem:[#allocation2 + $0x78] sm:$0xff]
    %v96 = vld [vmem:[#allocation2 + $0x80] sm:$0xff]
    %v97 = vld [vmem:[#allocation2 + $0x88] sm:$0xff]
    %v98 = vld [vmem:[#allocation2 + $0x90] sm:$0xff]
    %v99 = vld [vmem:[#allocation2 + $0x98] sm:$0xff]
    %v100 = vld [vmem:[#allocation2 + $0xa0] sm:$0xff]
    %v101 = vld [vmem:[#allocation2 + $0xa8] sm:$0xff]
    %v102 = vld [vmem:[#allocation2 + $0xb0] sm:$0xff]
    %v103 = vld [vmem:[#allocation2 + $0xb8] sm:$0xff]
    %v104 = vld [vmem:[#allocation2 + $0xc0] sm:$0xff]
    %v105 = vld [vmem:[#allocation2 + $0xc8] sm:$0xff]
    %v106 = vld [vmem:[#allocation2 + $0xd0] sm:$0xff]
    %v107 = vld [vmem:[#allocation2 + $0xd8] sm:$0xff]
    %v108 = vld [vmem:[#allocation2 + $0xe0] sm:$0xff]
    %v109 = vld [vmem:[#allocation2 + $0xe8] sm:$0xff]
    %v110 = vld [vmem:[#allocation2 + $0xf0] sm:$0xff]
    %v111 = vld [vmem:[#allocation2 + $0xf8] sm:$0xff]
    %v112 = vld [vmem:[#allocation5] sm:$0xff]
    %v113 = vld [vmem:[#allocation5 + $0x8] sm:$0xff]
    %v114 = vld [vmem:[#allocation5 + $0x10] sm:$0xff]
    %v115 = vld [vmem:[#allocation5 + $0x18] sm:$0xff]
    %v116 = vld [vmem:[#allocation5 + $0x20] sm:$0xff]
    %v117 = vld [vmem:[#allocation5 + $0x28] sm:$0xff]
    %v118 = vld [vmem:[#allocation5 + $0x30] sm:$0xff]
    %v119 = vld [vmem:[#allocation5 + $0x38] sm:$0xff]
    %v120 = vld [vmem:[#allocation5 + $0x40] sm:$0xff]
    %v121 = vld [vmem:[#allocation5 + $0x48] sm:$0xff]
    %v122 = vld [vmem:[#allocation5 + $0x50] sm:$0xff]
    %v123 = vld [vmem:[#allocation5 + $0x58] sm:$0xff]
    %v124 = vld [vmem:[#allocation5 + $0x60] sm:$0xff]
    %v125 = vld [vmem:[#allocation5 + $0x68] sm:$0xff]
    %v126 = vld [vmem:[#allocation5 + $0x70] sm:$0xff]
    %v127 = vld [vmem:[#allocation5 + $0x78] sm:$0xff]
    %v128 = vld [vmem:[#allocation5 + $0x80] sm:$0xff]
    %v129 = vld [vmem:[#allocation5 + $0x88] sm:$0xff]
    %v130 = vld [vmem:[#allocation5 + $0x90] sm:$0xff]
    %v131 = vld [vmem:[#allocation5 + $0x98] sm:$0xff]
    %v132 = vld [vmem:[#allocation5 + $0xa0] sm:$0xff]
    %v133 = vld [vmem:[#allocation5 + $0xa8] sm:$0xff]
    %v134 = vld [vmem:[#allocation5 + $0xb0] sm:$0xff]
    %v135 = vld [vmem:[#allocation5 + $0xb8] sm:$0xff]
    %v136 = vld [vmem:[#allocation5 + $0xc0] sm:$0xff]
    %v137 = vld [vmem:[#allocation5 + $0xc8] sm:$0xff]
    %v138 = vld [vmem:[#allocation5 + $0xd0] sm:$0xff]
    %v139 = vld [vmem:[#allocation5 + $0xd8] sm:$0xff]
    %v140 = vld [vmem:[#allocation5 + $0xe0] sm:$0xff]
    %v141 = vld [vmem:[#allocation5 + $0xe8] sm:$0xff]
    %v142 = vld [vmem:[#allocation5 + $0xf0] sm:$0xff]
    %v143 = vld [vmem:[#allocation5 + $0xf8] sm:$0xff]
    %144 = vmatpush.msra.mxu0 %v127
    %145 = vmatpush.msra.mxu0 %v126
    %146 = vmatpush.msra.mxu0 %v125
    %147 = vmatpush.msra.mxu0 %v124
    %148 = vmatpush.msra.mxu0 %v123
    %149 = vmatpush.msra.mxu0 %v122
    %150 = vmatpush.msra.mxu0 %v121
    %151 = vmatpush.msra.mxu0 %v120
    %152 = vmatpush.msra.mxu0 %v119
    %153 = vmatpush.msra.mxu0 %v118
    %154 = vmatpush.msra.mxu0 %v117
    %155 = vmatpush.msra.mxu0 %v116
    %156 = vmatpush.msra.mxu0 %v115
    %157 = vmatpush.msra.mxu0 %v114
    %158 = vmatpush.msra.mxu0 %v113
    %159 = vmatpush.msra.mxu0 %v112
    %160 = vmatmul.f32.gmra.mxu0 %v80
    %v161 = vpop.f32.mrf.mxu0
    %v162 = vadd.f32 0.0, %v161
    %163 = vmatmul.f32.gmra.mxu0 %v82
    %v164 = vpop.f32.mrf.mxu0
    %v165 = vadd.f32 0.0, %v164
    %166 = vmatmul.f32.gmra.mxu0 %v84
    %v167 = vpop.f32.mrf.mxu0
    %v168 = vadd.f32 0.0, %v167
    %169 = vmatmul.f32.gmra.mxu0 %v86
    %v170 = vpop.f32.mrf.mxu0
    %v171 = vadd.f32 0.0, %v170
    %172 = vmatmul.f32.gmra.mxu0 %v88
    %v173 = vpop.f32.mrf.mxu0
    %v174 = vadd.f32 0.0, %v173
    %175 = vmatmul.f32.gmra.mxu0 %v90
    %v176 = vpop.f32.mrf.mxu0
    %v177 = vadd.f32 0.0, %v176
    %178 = vmatmul.f32.gmra.mxu0 %v92
    %v179 = vpop.f32.mrf.mxu0
    %v180 = vadd.f32 0.0, %v179
    %181 = vmatmul.f32.gmra.mxu0 %v94
    %v182 = vpop.f32.mrf.mxu0
    %v183 = vadd.f32 0.0, %v182
    %184 = vmatmul.f32.gmra.mxu0 %v96
    %v185 = vpop.f32.mrf.mxu0
    %v186 = vadd.f32 0.0, %v185
    %187 = vmatmul.f32.gmra.mxu0 %v98
    %v188 = vpop.f32.mrf.mxu0
    %v189 = vadd.f32 0.0, %v188
    %190 = vmatmul.f32.gmra.mxu0 %v100
    %v191 = vpop.f32.mrf.mxu0
    %v192 = vadd.f32 0.0, %v191
    %193 = vmatmul.f32.gmra.mxu0 %v102
    %v194 = vpop.f32.mrf.mxu0
    %v195 = vadd.f32 0.0, %v194
    %196 = vmatmul.f32.gmra.mxu0 %v104
    %v197 = vpop.f32.mrf.mxu0
    %v198 = vadd.f32 0.0, %v197
    %199 = vmatmul.f32.gmra.mxu0 %v106
    %v200 = vpop.f32.mrf.mxu0
    %v201 = vadd.f32 0.0, %v200
    %202 = vmatmul.f32.gmra.mxu0 %v108
    %v203 = vpop.f32.mrf.mxu0
    %v204 = vadd.f32 0.0, %v203
    %205 = vmatmul.f32.gmra.mxu0 %v110
    %v206 = vpop.f32.mrf.mxu0
    %v207 = vadd.f32 0.0, %v206
    %208 = vdwg.mxu0
    %209 = vmatpush.msra.mxu0 %v143
    %210 = vmatpush.msra.mxu0 %v142
    %211 = vmatpush.msra.mxu0 %v141
    %212 = vmatpush.msra.mxu0 %v140
    %213 = vmatpush.msra.mxu0 %v139
    %214 = vmatpush.msra.mxu0 %v138
    %215 = vmatpush.msra.mxu0 %v137
    %216 = vmatpush.msra.mxu0 %v136
    %217 = vmatpush.msra.mxu0 %v135
    %218 = vmatpush.msra.mxu0 %v134
    %219 = vmatpush.msra.mxu0 %v133
    %220 = vmatpush.msra.mxu0 %v132
    %221 = vmatpush.msra.mxu0 %v131
    %222 = vmatpush.msra.mxu0 %v130
    %223 = vmatpush.msra.mxu0 %v129
    %224 = vmatpush.msra.mxu0 %v128
    %225 = vmatmul.f32.gmra.mxu0 %v81
    %v226 = vpop.f32.mrf.mxu0
    %v227 = vadd.f32 %v162, %v226
    %228 = vmatmul.f32.gmra.mxu0 %v83
    %v229 = vpop.f32.mrf.mxu0
    %v230 = vadd.f32 %v165, %v229
    %231 = vmatmul.f32.gmra.mxu0 %v85
    %v232 = vpop.f32.mrf.mxu0
    %v233 = vadd.f32 %v168, %v232
    %234 = vmatmul.f32.gmra.mxu0 %v87
    %v235 = vpop.f32.mrf.mxu0
    %v236 = vadd.f32 %v171, %v235
    %237 = vmatmul.f32.gmra.mxu0 %v89
    %v238 = vpop.f32.mrf.mxu0
    %v239 = vadd.f32 %v174, %v238
    %240 = vmatmul.f32.gmra.mxu0 %v91
    %v241 = vpop.f32.mrf.mxu0
    %v242 = vadd.f32 %v177, %v241
    %243 = vmatmul.f32.gmra.mxu0 %v93
    %v244 = vpop.f32.mrf.mxu0
    %v245 = vadd.f32 %v180, %v244
    %246 = vmatmul.f32.gmra.mxu0 %v95
    %v247 = vpop.f32.mrf.mxu0
    %v248 = vadd.f32 %v183, %v247
    %249 = vmatmul.f32.gmra.mxu0 %v97
    %v250 = vpop.f32.mrf.mxu0
    %v251 = vadd.f32 %v186, %v250
    %252 = vmatmul.f32.gmra.mxu0 %v99
    %v253 = vpop.f32.mrf.mxu0
    %v254 = vadd.f32 %v189, %v253
    %255 = vmatmul.f32.gmra.mxu0 %v101
    %v256 = vpop.f32.mrf.mxu0
    %v257 = vadd.f32 %v192, %v256
    %258 = vmatmul.f32.gmra.mxu0 %v103
    %v259 = vpop.f32.mrf.mxu0
    %v260 = vadd.f32 %v195, %v259
    %261 = vmatmul.f32.gmra.mxu0 %v105
    %v262 = vpop.f32.mrf.mxu0
    %v263 = vadd.f32 %v198, %v262
    %264 = vmatmul.f32.gmra.mxu0 %v107
    %v265 = vpop.f32.mrf.mxu0
    %v266 = vadd.f32 %v201, %v265
    %267 = vmatmul.f32.gmra.mxu0 %v109
    %v268 = vpop.f32.mrf.mxu0
    %v269 = vadd.f32 %v204, %v268
    %270 = vmatmul.f32.gmra.mxu0 %v111
    %v271 = vpop.f32.mrf.mxu0
    %v272 = vadd.f32 %v207, %v271
    %273 = vdwg.mxu0
    %v274 = vadd.f32 %v64, %v227
    %v275 = vadd.f32 %v65, %v230
    %v276 = vadd.f32 %v66, %v233
    %v277 = vadd.f32 %v67, %v236
    %v278 = vadd.f32 %v68, %v239
    %v279 = vadd.f32 %v69, %v242
    %v280 = vadd.f32 %v70, %v245
    %v281 = vadd.f32 %v71, %v248
    %v282 = vadd.f32 %v72, %v251
    %v283 = vadd.f32 %v73, %v254
    %v284 = vadd.f32 %v74, %v257
    %v285 = vadd.f32 %v75, %v260
    %v286 = vadd.f32 %v76, %v263
    %v287 = vadd.f32 %v77, %v266
    %v288 = vadd.f32 %v78, %v269
    %v289 = vadd.f32 %v79, %v272
    %290 = vst [vmem:[#allocation7] sm:$0xff] %v274
    %291 = vst [vmem:[#allocation7 + $0x8] sm:$0xff] %v275
    %292 = vst [vmem:[#allocation7 + $0x10] sm:$0xff] %v276
    %293 = vst [vmem:[#allocation7 + $0x18] sm:$0xff] %v277
    %294 = vst [vmem:[#allocation7 + $0x20] sm:$0xff] %v278
    %295 = vst [vmem:[#allocation7 + $0x28] sm:$0xff] %v279
    %296 = vst [vmem:[#allocation7 + $0x30] sm:$0xff] %v280
    %297 = vst [vmem:[#allocation7 + $0x38] sm:$0xff] %v281
    %298 = vst [vmem:[#allocation7 + $0x40] sm:$0xff] %v282
    %299 = vst [vmem:[#allocation7 + $0x48] sm:$0xff] %v283
    %300 = vst [vmem:[#allocation7 + $0x50] sm:$0xff] %v284
    %301 = vst [vmem:[#allocation7 + $0x58] sm:$0xff] %v285
    %302 = vst [vmem:[#allocation7 + $0x60] sm:$0xff] %v286
    %303 = vst [vmem:[#allocation7 + $0x68] sm:$0xff] %v287
    %304 = vst [vmem:[#allocation7 + $0x70] sm:$0xff] %v288
    %305 = vst [vmem:[#allocation7 + $0x78] sm:$0xff] %v289
    // Predicated region
    $region22: #{tpu_custom_call.1} parent=1 // pred_check
      %p306 = pneg %p44
    $region23: #{tpu_custom_call.1} parent=1 // pred_check_branch
      %308 = sbr.rel (%p306) target = $region25
    $region24: #{tpu_custom_call.1} parent=1 // pred_region
      %v309 = vld [vmem:[#allocation7] sm:$0xff]
      %v310 = vld [vmem:[#allocation7 + $0x8] sm:$0xff]
      %v311 = vld [vmem:[#allocation7 + $0x10] sm:$0xff]
      %v312 = vld [vmem:[#allocation7 + $0x18] sm:$0xff]
      %v313 = vld [vmem:[#allocation7 + $0x20] sm:$0xff]
      %v314 = vld [vmem:[#allocation7 + $0x28] sm:$0xff]
      %v315 = vld [vmem:[#allocation7 + $0x30] sm:$0xff]
      %v316 = vld [vmem:[#allocation7 + $0x38] sm:$0xff]
      %v317 = vld [vmem:[#allocation7 + $0x40] sm:$0xff]
      %v318 = vld [vmem:[#allocation7 + $0x48] sm:$0xff]
      %v319 = vld [vmem:[#allocation7 + $0x50] sm:$0xff]
      %v320 = vld [vmem:[#allocation7 + $0x58] sm:$0xff]
      %v321 = vld [vmem:[#allocation7 + $0x60] sm:$0xff]
      %v322 = vld [vmem:[#allocation7 + $0x68] sm:$0xff]
      %v323 = vld [vmem:[#allocation7 + $0x70] sm:$0xff]
      %v324 = vld [vmem:[#allocation7 + $0x78] sm:$0xff]
      %v325 = vmul.f32 %v309, 0.5
      %v326 = vmul.f32 %v310, 0.5
      %v327 = vmul.f32 %v311, 0.5
      %v328 = vmul.f32 %v312, 0.5
      %v329 = vmul.f32 %v313, 0.5
      %v330 = vmul.f32 %v314, 0.5
      %v331 = vmul.f32 %v315, 0.5
      %v332 = vmul.f32 %v316, 0.5
      %v333 = vmul.f32 %v317, 0.5
      %v334 = vmul.f32 %v318, 0.5
      %v335 = vmul.f32 %v319, 0.5
      %v336 = vmul.f32 %v320, 0.5
      %v337 = vmul.f32 %v321, 0.5
      %v338 = vmul.f32 %v322, 0.5
      %v339 = vmul.f32 %v323, 0.5
      %v340 = vmul.f32 %v324, 0.5
      %v341 = vmul.f32 %v309, 0.70710677
      %v342 = vmul.f32 %v310, 0.70710677
      %v343 = vmul.f32 %v311, 0.70710677
      %v344 = vmul.f32 %v312, 0.70710677
      %v345 = vmul.f32 %v313, 0.70710677
      %v346 = vmul.f32 %v314, 0.70710677
      %v347 = vmul.f32 %v315, 0.70710677
      %v348 = vmul.f32 %v316, 0.70710677
      %v349 = vmul.f32 %v317, 0.70710677
      %v350 = vmul.f32 %v318, 0.70710677
      %v351 = vmul.f32 %v319, 0.70710677
      %v352 = vmul.f32 %v320, 0.70710677
      %v353 = vmul.f32 %v321, 0.70710677
      %v354 = vmul.f32 %v322, 0.70710677
      %v355 = vmul.f32 %v323, 0.70710677
      %v356 = vmul.f32 %v324, 0.70710677
      %v357 = vmul.f32 %v341, %v341
      %v358 = vmin.f32 16.0, %v357
      %v359 = vmul.f32 %v358, 2.1237322e-06
      %v360 = vadd.f32 %v359, 0.00028619796
      %v361 = vmul.f32 %v358, %v360
      %v362 = vadd.f32 %v361, 0.0036580483
      %v363 = vmul.f32 %v358, %v362
      %v364 = vadd.f32 %v363, 0.05243302
      %v365 = vmul.f32 %v358, %v364
      %v366 = vadd.f32 %v365, 0.18741608
      %v367 = vmul.f32 %v358, %v366
      %v368 = vadd.f32 %v367, 1.1283791
      %v369 = vmul.f32 %v341, %v368
      %v370 = vmul.f32 %v358, 3.8918573e-05
      %v371 = vadd.f32 %v370, 0.001143296
      %v372 = vmul.f32 %v358, %v371
      %v373 = vadd.f32 %v372, 0.014752088
      %v374 = vmul.f32 %v358, %v373
      %v375 = vadd.f32 %v374, 0.112945676
      %v376 = vmul.f32 %v358, %v375
      %v377 = vadd.f32 %v376, 0.4994258
      %v378 = vmul.f32 %v358, %v377
      %v379 = vadd.f32 %v378, 1.0
      %v380 = vrcp.pop %v379
      %v381 = vmul.f32 %v379, %v380
      %v382 = vsub.f32 1.0, %v381
      %v383 = vmul.f32 %v380, %v382
      %v384 = vadd.f32 %v380, %v383
      %vm385 = vweird.f32 %v379
      %vm386 = vweird.f32 %v380
      %vm387 = vmor %vm385, %vm386
      %v388 = vsel %vm387, %v380, %v384
      %v389 = vand.u32 2147483647, %v379
      %vm390 = vcmp.eq.f32.partialorder %v389, 8.507059e+37
      %v391 = vand.u32 %v379, 2147483648
      %v392 = vor.u32 1.1754944e-38, %v391
      %v393 = vsel %vm390, %v392, %v388
      %v394 = vmul.f32 %v369, %v393
      %v395 = vmin.f32 %v394, 1.0
      %v396 = vmax.f32 %v395, -1.0
      %v397 = vmul.f32 %v342, %v342
      %v398 = vmin.f32 16.0, %v397
      %v399 = vmul.f32 %v398, 2.1237322e-06
      %v400 = vadd.f32 %v399, 0.00028619796
      %v401 = vmul.f32 %v398, %v400
      %v402 = vadd.f32 %v401, 0.0036580483
      %v403 = vmul.f32 %v398, %v402
      %v404 = vadd.f32 %v403, 0.05243302
      %v405 = vmul.f32 %v398, %v404
      %v406 = vadd.f32 %v405, 0.18741608
      %v407 = vmul.f32 %v398, %v406
      %v408 = vadd.f32 %v407, 1.1283791
      %v409 = vmul.f32 %v342, %v408
      %v410 = vmul.f32 %v398, 3.8918573e-05
      %v411 = vadd.f32 %v410, 0.001143296
      %v412 = vmul.f32 %v398, %v411
      %v413 = vadd.f32 %v412, 0.014752088
      %v414 = vmul.f32 %v398, %v413
      %v415 = vadd.f32 %v414, 0.112945676
      %v416 = vmul.f32 %v398, %v415
      %v417 = vadd.f32 %v416, 0.4994258
      %v418 = vmul.f32 %v398, %v417
      %v419 = vadd.f32 %v418, 1.0
      %v420 = vrcp.pop %v419
      %v421 = vmul.f32 %v419, %v420
      %v422 = vsub.f32 1.0, %v421
      %v423 = vmul.f32 %v420, %v422
      %v424 = vadd.f32 %v420, %v423
      %vm425 = vweird.f32 %v419
      %vm426 = vweird.f32 %v420
      %vm427 = vmor %vm425, %vm426
      %v428 = vsel %vm427, %v420, %v424
      %v429 = vand.u32 2147483647, %v419
      %vm430 = vcmp.eq.f32.partialorder %v429, 8.507059e+37
      %v431 = vand.u32 %v419, 2147483648
      %v432 = vor.u32 1.1754944e-38, %v431
      %v433 = vsel %vm430, %v432, %v428
      %v434 = vmul.f32 %v409, %v433
      %v435 = vmin.f32 %v434, 1.0
      %v436 = vmax.f32 %v435, -1.0
      %v437 = vmul.f32 %v343, %v343
      %v438 = vmin.f32 16.0, %v437
      %v439 = vmul.f32 %v438, 2.1237322e-06
      %v440 = vadd.f32 %v439, 0.00028619796
      %v441 = vmul.f32 %v438, %v440
      %v442 = vadd.f32 %v441, 0.0036580483
      %v443 = vmul.f32 %v438, %v442
      %v444 = vadd.f32 %v443, 0.05243302
      %v445 = vmul.f32 %v438, %v444
      %v446 = vadd.f32 %v445, 0.18741608
      %v447 = vmul.f32 %v438, %v446
      %v448 = vadd.f32 %v447, 1.1283791
      %v449 = vmul.f32 %v343, %v448
      %v450 = vmul.f32 %v438, 3.8918573e-05
      %v451 = vadd.f32 %v450, 0.001143296
      %v452 = vmul.f32 %v438, %v451
      %v453 = vadd.f32 %v452, 0.014752088
      %v454 = vmul.f32 %v438, %v453
      %v455 = vadd.f32 %v454, 0.112945676
      %v456 = vmul.f32 %v438, %v455
      %v457 = vadd.f32 %v456, 0.4994258
      %v458 = vmul.f32 %v438, %v457
      %v459 = vadd.f32 %v458, 1.0
      %v460 = vrcp.pop %v459
      %v461 = vmul.f32 %v459, %v460
      %v462 = vsub.f32 1.0, %v461
      %v463 = vmul.f32 %v460, %v462
      %v464 = vadd.f32 %v460, %v463
      %vm465 = vweird.f32 %v459
      %vm466 = vweird.f32 %v460
      %vm467 = vmor %vm465, %vm466
      %v468 = vsel %vm467, %v460, %v464
      %v469 = vand.u32 2147483647, %v459
      %vm470 = vcmp.eq.f32.partialorder %v469, 8.507059e+37
      %v471 = vand.u32 %v459, 2147483648
      %v472 = vor.u32 1.1754944e-38, %v471
      %v473 = vsel %vm470, %v472, %v468
      %v474 = vmul.f32 %v449, %v473
      %v475 = vmin.f32 %v474, 1.0
      %v476 = vmax.f32 %v475, -1.0
      %v477 = vmul.f32 %v344, %v344
      %v478 = vmin.f32 16.0, %v477
      %v479 = vmul.f32 %v478, 2.1237322e-06
      %v480 = vadd.f32 %v479, 0.00028619796
      %v481 = vmul.f32 %v478, %v480
      %v482 = vadd.f32 %v481, 0.0036580483
      %v483 = vmul.f32 %v478, %v482
      %v484 = vadd.f32 %v483, 0.05243302
      %v485 = vmul.f32 %v478, %v484
      %v486 = vadd.f32 %v485, 0.18741608
      %v487 = vmul.f32 %v478, %v486
      %v488 = vadd.f32 %v487, 1.1283791
      %v489 = vmul.f32 %v344, %v488
      %v490 = vmul.f32 %v478, 3.8918573e-05
      %v491 = vadd.f32 %v490, 0.001143296
      %v492 = vmul.f32 %v478, %v491
      %v493 = vadd.f32 %v492, 0.014752088
      %v494 = vmul.f32 %v478, %v493
      %v495 = vadd.f32 %v494, 0.112945676
      %v496 = vmul.f32 %v478, %v495
      %v497 = vadd.f32 %v496, 0.4994258
      %v498 = vmul.f32 %v478, %v497
      %v499 = vadd.f32 %v498, 1.0
      %v500 = vrcp.pop %v499
      %v501 = vmul.f32 %v499, %v500
      %v502 = vsub.f32 1.0, %v501
      %v503 = vmul.f32 %v500, %v502
      %v504 = vadd.f32 %v500, %v503
      %vm505 = vweird.f32 %v499
      %vm506 = vweird.f32 %v500
      %vm507 = vmor %vm505, %vm506
      %v508 = vsel %vm507, %v500, %v504
      %v509 = vand.u32 2147483647, %v499
      %vm510 = vcmp.eq.f32.partialorder %v509, 8.507059e+37
      %v511 = vand.u32 %v499, 2147483648
      %v512 = vor.u32 1.1754944e-38, %v511
      %v513 = vsel %vm510, %v512, %v508
      %v514 = vmul.f32 %v489, %v513
      %v515 = vmin.f32 %v514, 1.0
      %v516 = vmax.f32 %v515, -1.0
      %v517 = vmul.f32 %v345, %v345
      %v518 = vmin.f32 16.0, %v517
      %v519 = vmul.f32 %v518, 2.1237322e-06
      %v520 = vadd.f32 %v519, 0.00028619796
      %v521 = vmul.f32 %v518, %v520
      %v522 = vadd.f32 %v521, 0.0036580483
      %v523 = vmul.f32 %v518, %v522
      %v524 = vadd.f32 %v523, 0.05243302
      %v525 = vmul.f32 %v518, %v524
      %v526 = vadd.f32 %v525, 0.18741608
      %v527 = vmul.f32 %v518, %v526
      %v528 = vadd.f32 %v527, 1.1283791
      %v529 = vmul.f32 %v345, %v528
      %v530 = vmul.f32 %v518, 3.8918573e-05
      %v531 = vadd.f32 %v530, 0.001143296
      %v532 = vmul.f32 %v518, %v531
      %v533 = vadd.f32 %v532, 0.014752088
      %v534 = vmul.f32 %v518, %v533
      %v535 = vadd.f32 %v534, 0.112945676
      %v536 = vmul.f32 %v518, %v535
      %v537 = vadd.f32 %v536, 0.4994258
      %v538 = vmul.f32 %v518, %v537
      %v539 = vadd.f32 %v538, 1.0
      %v540 = vrcp.pop %v539
      %v541 = vmul.f32 %v539, %v540
      %v542 = vsub.f32 1.0, %v541
      %v543 = vmul.f32 %v540, %v542
      %v544 = vadd.f32 %v540, %v543
      %vm545 = vweird.f32 %v539
      %vm546 = vweird.f32 %v540
      %vm547 = vmor %vm545, %vm546
      %v548 = vsel %vm547, %v540, %v544
      %v549 = vand.u32 2147483647, %v539
      %vm550 = vcmp.eq.f32.partialorder %v549, 8.507059e+37
      %v551 = vand.u32 %v539, 2147483648
      %v552 = vor.u32 1.1754944e-38, %v551
      %v553 = vsel %vm550, %v552, %v548
      %v554 = vmul.f32 %v529, %v553
      %v555 = vmin.f32 %v554, 1.0
      %v556 = vmax.f32 %v555, -1.0
      %v557 = vmul.f32 %v346, %v346
      %v558 = vmin.f32 16.0, %v557
      %v559 = vmul.f32 %v558, 2.1237322e-06
      %v560 = vadd.f32 %v559, 0.00028619796
      %v561 = vmul.f32 %v558, %v560
      %v562 = vadd.f32 %v561, 0.0036580483
      %v563 = vmul.f32 %v558, %v562
      %v564 = vadd.f32 %v563, 0.05243302
      %v565 = vmul.f32 %v558, %v564
      %v566 = vadd.f32 %v565, 0.18741608
      %v567 = vmul.f32 %v558, %v566
      %v568 = vadd.f32 %v567, 1.1283791
      %v569 = vmul.f32 %v346, %v568
      %v570 = vmul.f32 %v558, 3.8918573e-05
      %v571 = vadd.f32 %v570, 0.001143296
      %v572 = vmul.f32 %v558, %v571
      %v573 = vadd.f32 %v572, 0.014752088
      %v574 = vmul.f32 %v558, %v573
      %v575 = vadd.f32 %v574, 0.112945676
      %v576 = vmul.f32 %v558, %v575
      %v577 = vadd.f32 %v576, 0.4994258
      %v578 = vmul.f32 %v558, %v577
      %v579 = vadd.f32 %v578, 1.0
      %v580 = vrcp.pop %v579
      %v581 = vmul.f32 %v579, %v580
      %v582 = vsub.f32 1.0, %v581
      %v583 = vmul.f32 %v580, %v582
      %v584 = vadd.f32 %v580, %v583
      %vm585 = vweird.f32 %v579
      %vm586 = vweird.f32 %v580
      %vm587 = vmor %vm585, %vm586
      %v588 = vsel %vm587, %v580, %v584
      %v589 = vand.u32 2147483647, %v579
      %vm590 = vcmp.eq.f32.partialorder %v589, 8.507059e+37
      %v591 = vand.u32 %v579, 2147483648
      %v592 = vor.u32 1.1754944e-38, %v591
      %v593 = vsel %vm590, %v592, %v588
      %v594 = vmul.f32 %v569, %v593
      %v595 = vmin.f32 %v594, 1.0
      %v596 = vmax.f32 %v595, -1.0
      %v597 = vmul.f32 %v347, %v347
      %v598 = vmin.f32 16.0, %v597
      %v599 = vmul.f32 %v598, 2.1237322e-06
      %v600 = vadd.f32 %v599, 0.00028619796
      %v601 = vmul.f32 %v598, %v600
      %v602 = vadd.f32 %v601, 0.0036580483
      %v603 = vmul.f32 %v598, %v602
      %v604 = vadd.f32 %v603, 0.05243302
      %v605 = vmul.f32 %v598, %v604
      %v606 = vadd.f32 %v605, 0.18741608
      %v607 = vmul.f32 %v598, %v606
      %v608 = vadd.f32 %v607, 1.1283791
      %v609 = vmul.f32 %v347, %v608
      %v610 = vmul.f32 %v598, 3.8918573e-05
      %v611 = vadd.f32 %v610, 0.001143296
      %v612 = vmul.f32 %v598, %v611
      %v613 = vadd.f32 %v612, 0.014752088
      %v614 = vmul.f32 %v598, %v613
      %v615 = vadd.f32 %v614, 0.112945676
      %v616 = vmul.f32 %v598, %v615
      %v617 = vadd.f32 %v616, 0.4994258
      %v618 = vmul.f32 %v598, %v617
      %v619 = vadd.f32 %v618, 1.0
      %v620 = vrcp.pop %v619
      %v621 = vmul.f32 %v619, %v620
      %v622 = vsub.f32 1.0, %v621
      %v623 = vmul.f32 %v620, %v622
      %v624 = vadd.f32 %v620, %v623
      %vm625 = vweird.f32 %v619
      %vm626 = vweird.f32 %v620
      %vm627 = vmor %vm625, %vm626
      %v628 = vsel %vm627, %v620, %v624
      %v629 = vand.u32 2147483647, %v619
      %vm630 = vcmp.eq.f32.partialorder %v629, 8.507059e+37
      %v631 = vand.u32 %v619, 2147483648
      %v632 = vor.u32 1.1754944e-38, %v631
      %v633 = vsel %vm630, %v632, %v628
      %v634 = vmul.f32 %v609, %v633
      %v635 = vmin.f32 %v634, 1.0
      %v636 = vmax.f32 %v635, -1.0
      %v637 = vmul.f32 %v348, %v348
      %v638 = vmin.f32 16.0, %v637
      %v639 = vmul.f32 %v638, 2.1237322e-06
      %v640 = vadd.f32 %v639, 0.00028619796
      %v641 = vmul.f32 %v638, %v640
      %v642 = vadd.f32 %v641, 0.0036580483
      %v643 = vmul.f32 %v638, %v642
      %v644 = vadd.f32 %v643, 0.05243302
      %v645 = vmul.f32 %v638, %v644
      %v646 = vadd.f32 %v645, 0.18741608
      %v647 = vmul.f32 %v638, %v646
      %v648 = vadd.f32 %v647, 1.1283791
      %v649 = vmul.f32 %v348, %v648
      %v650 = vmul.f32 %v638, 3.8918573e-05
      %v651 = vadd.f32 %v650, 0.001143296
      %v652 = vmul.f32 %v638, %v651
      %v653 = vadd.f32 %v652, 0.014752088
      %v654 = vmul.f32 %v638, %v653
      %v655 = vadd.f32 %v654, 0.112945676
      %v656 = vmul.f32 %v638, %v655
      %v657 = vadd.f32 %v656, 0.4994258
      %v658 = vmul.f32 %v638, %v657
      %v659 = vadd.f32 %v658, 1.0
      %v660 = vrcp.pop %v659
      %v661 = vmul.f32 %v659, %v660
      %v662 = vsub.f32 1.0, %v661
      %v663 = vmul.f32 %v660, %v662
      %v664 = vadd.f32 %v660, %v663
      %vm665 = vweird.f32 %v659
      %vm666 = vweird.f32 %v660
      %vm667 = vmor %vm665, %vm666
      %v668 = vsel %vm667, %v660, %v664
      %v669 = vand.u32 2147483647, %v659
      %vm670 = vcmp.eq.f32.partialorder %v669, 8.507059e+37
      %v671 = vand.u32 %v659, 2147483648
      %v672 = vor.u32 1.1754944e-38, %v671
      %v673 = vsel %vm670, %v672, %v668
      %v674 = vmul.f32 %v649, %v673
      %v675 = vmin.f32 %v674, 1.0
      %v676 = vmax.f32 %v675, -1.0
      %v677 = vmul.f32 %v349, %v349
      %v678 = vmin.f32 16.0, %v677
      %v679 = vmul.f32 %v678, 2.1237322e-06
      %v680 = vadd.f32 %v679, 0.00028619796
      %v681 = vmul.f32 %v678, %v680
      %v682 = vadd.f32 %v681, 0.0036580483
      %v683 = vmul.f32 %v678, %v682
      %v684 = vadd.f32 %v683, 0.05243302
      %v685 = vmul.f32 %v678, %v684
      %v686 = vadd.f32 %v685, 0.18741608
      %v687 = vmul.f32 %v678, %v686
      %v688 = vadd.f32 %v687, 1.1283791
      %v689 = vmul.f32 %v349, %v688
      %v690 = vmul.f32 %v678, 3.8918573e-05
      %v691 = vadd.f32 %v690, 0.001143296
      %v692 = vmul.f32 %v678, %v691
      %v693 = vadd.f32 %v692, 0.014752088
      %v694 = vmul.f32 %v678, %v693
      %v695 = vadd.f32 %v694, 0.112945676
      %v696 = vmul.f32 %v678, %v695
      %v697 = vadd.f32 %v696, 0.4994258
      %v698 = vmul.f32 %v678, %v697
      %v699 = vadd.f32 %v698, 1.0
      %v700 = vrcp.pop %v699
      %v701 = vmul.f32 %v699, %v700
      %v702 = vsub.f32 1.0, %v701
      %v703 = vmul.f32 %v700, %v702
      %v704 = vadd.f32 %v700, %v703
      %vm705 = vweird.f32 %v699
      %vm706 = vweird.f32 %v700
      %vm707 = vmor %vm705, %vm706
      %v708 = vsel %vm707, %v700, %v704
      %v709 = vand.u32 2147483647, %v699
      %vm710 = vcmp.eq.f32.partialorder %v709, 8.507059e+37
      %v711 = vand.u32 %v699, 2147483648
      %v712 = vor.u32 1.1754944e-38, %v711
      %v713 = vsel %vm710, %v712, %v708
      %v714 = vmul.f32 %v689, %v713
      %v715 = vmin.f32 %v714, 1.0
      %v716 = vmax.f32 %v715, -1.0
      %v717 = vmul.f32 %v350, %v350
      %v718 = vmin.f32 16.0, %v717
      %v719 = vmul.f32 %v718, 2.1237322e-06
      %v720 = vadd.f32 %v719, 0.00028619796
      %v721 = vmul.f32 %v718, %v720
      %v722 = vadd.f32 %v721, 0.0036580483
      %v723 = vmul.f32 %v718, %v722
      %v724 = vadd.f32 %v723, 0.05243302
      %v725 = vmul.f32 %v718, %v724
      %v726 = vadd.f32 %v725, 0.18741608
      %v727 = vmul.f32 %v718, %v726
      %v728 = vadd.f32 %v727, 1.1283791
      %v729 = vmul.f32 %v350, %v728
      %v730 = vmul.f32 %v718, 3.8918573e-05
      %v731 = vadd.f32 %v730, 0.001143296
      %v732 = vmul.f32 %v718, %v731
      %v733 = vadd.f32 %v732, 0.014752088
      %v734 = vmul.f32 %v718, %v733
      %v735 = vadd.f32 %v734, 0.112945676
      %v736 = vmul.f32 %v718, %v735
      %v737 = vadd.f32 %v736, 0.4994258
      %v738 = vmul.f32 %v718, %v737
      %v739 = vadd.f32 %v738, 1.0
      %v740 = vrcp.pop %v739
      %v741 = vmul.f32 %v739, %v740
      %v742 = vsub.f32 1.0, %v741
      %v743 = vmul.f32 %v740, %v742
      %v744 = vadd.f32 %v740, %v743
      %vm745 = vweird.f32 %v739
      %vm746 = vweird.f32 %v740
      %vm747 = vmor %vm745, %vm746
      %v748 = vsel %vm747, %v740, %v744
      %v749 = vand.u32 2147483647, %v739
      %vm750 = vcmp.eq.f32.partialorder %v749, 8.507059e+37
      %v751 = vand.u32 %v739, 2147483648
      %v752 = vor.u32 1.1754944e-38, %v751
      %v753 = vsel %vm750, %v752, %v748
      %v754 = vmul.f32 %v729, %v753
      %v755 = vmin.f32 %v754, 1.0
      %v756 = vmax.f32 %v755, -1.0
      %v757 = vmul.f32 %v351, %v351
      %v758 = vmin.f32 16.0, %v757
      %v759 = vmul.f32 %v758, 2.1237322e-06
      %v760 = vadd.f32 %v759, 0.00028619796
      %v761 = vmul.f32 %v758, %v760
      %v762 = vadd.f32 %v761, 0.0036580483
      %v763 = vmul.f32 %v758, %v762
      %v764 = vadd.f32 %v763, 0.05243302
      %v765 = vmul.f32 %v758, %v764
      %v766 = vadd.f32 %v765, 0.18741608
      %v767 = vmul.f32 %v758, %v766
      %v768 = vadd.f32 %v767, 1.1283791
      %v769 = vmul.f32 %v351, %v768
      %v770 = vmul.f32 %v758, 3.8918573e-05
      %v771 = vadd.f32 %v770, 0.001143296
      %v772 = vmul.f32 %v758, %v771
      %v773 = vadd.f32 %v772, 0.014752088
      %v774 = vmul.f32 %v758, %v773
      %v775 = vadd.f32 %v774, 0.112945676
      %v776 = vmul.f32 %v758, %v775
      %v777 = vadd.f32 %v776, 0.4994258
      %v778 = vmul.f32 %v758, %v777
      %v779 = vadd.f32 %v778, 1.0
      %v780 = vrcp.pop %v779
      %v781 = vmul.f32 %v779, %v780
      %v782 = vsub.f32 1.0, %v781
      %v783 = vmul.f32 %v780, %v782
      %v784 = vadd.f32 %v780, %v783
      %vm785 = vweird.f32 %v779
      %vm786 = vweird.f32 %v780
      %vm787 = vmor %vm785, %vm786
      %v788 = vsel %vm787, %v780, %v784
      %v789 = vand.u32 2147483647, %v779
      %vm790 = vcmp.eq.f32.partialorder %v789, 8.507059e+37
      %v791 = vand.u32 %v779, 2147483648
      %v792 = vor.u32 1.1754944e-38, %v791
      %v793 = vsel %vm790, %v792, %v788
      %v794 = vmul.f32 %v769, %v793
      %v795 = vmin.f32 %v794, 1.0
      %v796 = vmax.f32 %v795, -1.0
      %v797 = vmul.f32 %v352, %v352
      %v798 = vmin.f32 16.0, %v797
      %v799 = vmul.f32 %v798, 2.1237322e-06
      %v800 = vadd.f32 %v799, 0.00028619796
      %v801 = vmul.f32 %v798, %v800
      %v802 = vadd.f32 %v801, 0.0036580483
      %v803 = vmul.f32 %v798, %v802
      %v804 = vadd.f32 %v803, 0.05243302
      %v805 = vmul.f32 %v798, %v804
      %v806 = vadd.f32 %v805, 0.18741608
      %v807 = vmul.f32 %v798, %v806
      %v808 = vadd.f32 %v807, 1.1283791
      %v809 = vmul.f32 %v352, %v808
      %v810 = vmul.f32 %v798, 3.8918573e-05
      %v811 = vadd.f32 %v810, 0.001143296
      %v812 = vmul.f32 %v798, %v811
      %v813 = vadd.f32 %v812, 0.014752088
      %v814 = vmul.f32 %v798, %v813
      %v815 = vadd.f32 %v814, 0.112945676
      %v816 = vmul.f32 %v798, %v815
      %v817 = vadd.f32 %v816, 0.4994258
      %v818 = vmul.f32 %v798, %v817
      %v819 = vadd.f32 %v818, 1.0
      %v820 = vrcp.pop %v819
      %v821 = vmul.f32 %v819, %v820
      %v822 = vsub.f32 1.0, %v821
      %v823 = vmul.f32 %v820, %v822
      %v824 = vadd.f32 %v820, %v823
      %vm825 = vweird.f32 %v819
      %vm826 = vweird.f32 %v820
      %vm827 = vmor %vm825, %vm826
      %v828 = vsel %vm827, %v820, %v824
      %v829 = vand.u32 2147483647, %v819
      %vm830 = vcmp.eq.f32.partialorder %v829, 8.507059e+37
      %v831 = vand.u32 %v819, 2147483648
      %v832 = vor.u32 1.1754944e-38, %v831
      %v833 = vsel %vm830, %v832, %v828
      %v834 = vmul.f32 %v809, %v833
      %v835 = vmin.f32 %v834, 1.0
      %v836 = vmax.f32 %v835, -1.0
      %v837 = vmul.f32 %v353, %v353
      %v838 = vmin.f32 16.0, %v837
      %v839 = vmul.f32 %v838, 2.1237322e-06
      %v840 = vadd.f32 %v839, 0.00028619796
      %v841 = vmul.f32 %v838, %v840
      %v842 = vadd.f32 %v841, 0.0036580483
      %v843 = vmul.f32 %v838, %v842
      %v844 = vadd.f32 %v843, 0.05243302
      %v845 = vmul.f32 %v838, %v844
      %v846 = vadd.f32 %v845, 0.18741608
      %v847 = vmul.f32 %v838, %v846
      %v848 = vadd.f32 %v847, 1.1283791
      %v849 = vmul.f32 %v353, %v848
      %v850 = vmul.f32 %v838, 3.8918573e-05
      %v851 = vadd.f32 %v850, 0.001143296
      %v852 = vmul.f32 %v838, %v851
      %v853 = vadd.f32 %v852, 0.014752088
      %v854 = vmul.f32 %v838, %v853
      %v855 = vadd.f32 %v854, 0.112945676
      %v856 = vmul.f32 %v838, %v855
      %v857 = vadd.f32 %v856, 0.4994258
      %v858 = vmul.f32 %v838, %v857
      %v859 = vadd.f32 %v858, 1.0
      %v860 = vrcp.pop %v859
      %v861 = vmul.f32 %v859, %v860
      %v862 = vsub.f32 1.0, %v861
      %v863 = vmul.f32 %v860, %v862
      %v864 = vadd.f32 %v860, %v863
      %vm865 = vweird.f32 %v859
      %vm866 = vweird.f32 %v860
      %vm867 = vmor %vm865, %vm866
      %v868 = vsel %vm867, %v860, %v864
      %v869 = vand.u32 2147483647, %v859
      %vm870 = vcmp.eq.f32.partialorder %v869, 8.507059e+37
      %v871 = vand.u32 %v859, 2147483648
      %v872 = vor.u32 1.1754944e-38, %v871
      %v873 = vsel %vm870, %v872, %v868
      %v874 = vmul.f32 %v849, %v873
      %v875 = vmin.f32 %v874, 1.0
      %v876 = vmax.f32 %v875, -1.0
      %v877 = vmul.f32 %v354, %v354
      %v878 = vmin.f32 16.0, %v877
      %v879 = vmul.f32 %v878, 2.1237322e-06
      %v880 = vadd.f32 %v879, 0.00028619796
      %v881 = vmul.f32 %v878, %v880
      %v882 = vadd.f32 %v881, 0.0036580483
      %v883 = vmul.f32 %v878, %v882
      %v884 = vadd.f32 %v883, 0.05243302
      %v885 = vmul.f32 %v878, %v884
      %v886 = vadd.f32 %v885, 0.18741608
      %v887 = vmul.f32 %v878, %v886
      %v888 = vadd.f32 %v887, 1.1283791
      %v889 = vmul.f32 %v354, %v888
      %v890 = vmul.f32 %v878, 3.8918573e-05
      %v891 = vadd.f32 %v890, 0.001143296
      %v892 = vmul.f32 %v878, %v891
      %v893 = vadd.f32 %v892, 0.014752088
      %v894 = vmul.f32 %v878, %v893
      %v895 = vadd.f32 %v894, 0.112945676
      %v896 = vmul.f32 %v878, %v895
      %v897 = vadd.f32 %v896, 0.4994258
      %v898 = vmul.f32 %v878, %v897
      %v899 = vadd.f32 %v898, 1.0
      %v900 = vrcp.pop %v899
      %v901 = vmul.f32 %v899, %v900
      %v902 = vsub.f32 1.0, %v901
      %v903 = vmul.f32 %v900, %v902
      %v904 = vadd.f32 %v900, %v903
      %vm905 = vweird.f32 %v899
      %vm906 = vweird.f32 %v900
      %vm907 = vmor %vm905, %vm906
      %v908 = vsel %vm907, %v900, %v904
      %v909 = vand.u32 2147483647, %v899
      %vm910 = vcmp.eq.f32.partialorder %v909, 8.507059e+37
      %v911 = vand.u32 %v899, 2147483648
      %v912 = vor.u32 1.1754944e-38, %v911
      %v913 = vsel %vm910, %v912, %v908
      %v914 = vmul.f32 %v889, %v913
      %v915 = vmin.f32 %v914, 1.0
      %v916 = vmax.f32 %v915, -1.0
      %v917 = vmul.f32 %v355, %v355
      %v918 = vmin.f32 16.0, %v917
      %v919 = vmul.f32 %v918, 2.1237322e-06
      %v920 = vadd.f32 %v919, 0.00028619796
      %v921 = vmul.f32 %v918, %v920
      %v922 = vadd.f32 %v921, 0.0036580483
      %v923 = vmul.f32 %v918, %v922
      %v924 = vadd.f32 %v923, 0.05243302
      %v925 = vmul.f32 %v918, %v924
      %v926 = vadd.f32 %v925, 0.18741608
      %v927 = vmul.f32 %v918, %v926
      %v928 = vadd.f32 %v927, 1.1283791
      %v929 = vmul.f32 %v355, %v928
      %v930 = vmul.f32 %v918, 3.8918573e-05
      %v931 = vadd.f32 %v930, 0.001143296
      %v932 = vmul.f32 %v918, %v931
      %v933 = vadd.f32 %v932, 0.014752088
      %v934 = vmul.f32 %v918, %v933
      %v935 = vadd.f32 %v934, 0.112945676
      %v936 = vmul.f32 %v918, %v935
      %v937 = vadd.f32 %v936, 0.4994258
      %v938 = vmul.f32 %v918, %v937
      %v939 = vadd.f32 %v938, 1.0
      %v940 = vrcp.pop %v939
      %v941 = vmul.f32 %v939, %v940
      %v942 = vsub.f32 1.0, %v941
      %v943 = vmul.f32 %v940, %v942
      %v944 = vadd.f32 %v940, %v943
      %vm945 = vweird.f32 %v939
      %vm946 = vweird.f32 %v940
      %vm947 = vmor %vm945, %vm946
      %v948 = vsel %vm947, %v940, %v944
      %v949 = vand.u32 2147483647, %v939
      %vm950 = vcmp.eq.f32.partialorder %v949, 8.507059e+37
      %v951 = vand.u32 %v939, 2147483648
      %v952 = vor.u32 1.1754944e-38, %v951
      %v953 = vsel %vm950, %v952, %v948
      %v954 = vmul.f32 %v929, %v953
      %v955 = vmin.f32 %v954, 1.0
      %v956 = vmax.f32 %v955, -1.0
      %v957 = vmul.f32 %v356, %v356
      %v958 = vmin.f32 16.0, %v957
      %v959 = vmul.f32 %v958, 2.1237322e-06
      %v960 = vadd.f32 %v959, 0.00028619796
      %v961 = vmul.f32 %v958, %v960
      %v962 = vadd.f32 %v961, 0.0036580483
      %v963 = vmul.f32 %v958, %v962
      %v964 = vadd.f32 %v963, 0.05243302
      %v965 = vmul.f32 %v958, %v964
      %v966 = vadd.f32 %v965, 0.18741608
      %v967 = vmul.f32 %v958, %v966
      %v968 = vadd.f32 %v967, 1.1283791
      %v969 = vmul.f32 %v356, %v968
      %v970 = vmul.f32 %v958, 3.8918573e-05
      %v971 = vadd.f32 %v970, 0.001143296
      %v972 = vmul.f32 %v958, %v971
      %v973 = vadd.f32 %v972, 0.014752088
      %v974 = vmul.f32 %v958, %v973
      %v975 = vadd.f32 %v974, 0.112945676
      %v976 = vmul.f32 %v958, %v975
      %v977 = vadd.f32 %v976, 0.4994258
      %v978 = vmul.f32 %v958, %v977
      %v979 = vadd.f32 %v978, 1.0
      %v980 = vrcp.pop %v979
      %v981 = vmul.f32 %v979, %v980
      %v982 = vsub.f32 1.0, %v981
      %v983 = vmul.f32 %v980, %v982
      %v984 = vadd.f32 %v980, %v983
      %vm985 = vweird.f32 %v979
      %vm986 = vweird.f32 %v980
      %vm987 = vmor %vm985, %vm986
      %v988 = vsel %vm987, %v980, %v984
      %v989 = vand.u32 2147483647, %v979
      %vm990 = vcmp.eq.f32.partialorder %v989, 8.507059e+37
      %v991 = vand.u32 %v979, 2147483648
      %v992 = vor.u32 1.1754944e-38, %v991
      %v993 = vsel %vm990, %v992, %v988
      %v994 = vmul.f32 %v969, %v993
      %v995 = vmin.f32 %v994, 1.0
      %v996 = vmax.f32 %v995, -1.0
      %v997 = vadd.f32 %v396, 1.0
      %v998 = vadd.f32 %v436, 1.0
      %v999 = vadd.f32 %v476, 1.0
      %v1000 = vadd.f32 %v516, 1.0
      %v1001 = vadd.f32 %v556, 1.0
      %v1002 = vadd.f32 %v596, 1.0
      %v1003 = vadd.f32 %v636, 1.0
      %v1004 = vadd.f32 %v676, 1.0
      %v1005 = vadd.f32 %v716, 1.0
      %v1006 = vadd.f32 %v756, 1.0
      %v1007 = vadd.f32 %v796, 1.0
      %v1008 = vadd.f32 %v836, 1.0
      %v1009 = vadd.f32 %v876, 1.0
      %v1010 = vadd.f32 %v916, 1.0
      %v1011 = vadd.f32 %v956, 1.0
      %v1012 = vadd.f32 %v996, 1.0
      %v1013 = vmul.f32 %v325, %v997
      %v1014 = vmul.f32 %v326, %v998
      %v1015 = vmul.f32 %v327, %v999
      %v1016 = vmul.f32 %v328, %v1000
      %v1017 = vmul.f32 %v329, %v1001
      %v1018 = vmul.f32 %v330, %v1002
      %v1019 = vmul.f32 %v331, %v1003
      %v1020 = vmul.f32 %v332, %v1004
      %v1021 = vmul.f32 %v333, %v1005
      %v1022 = vmul.f32 %v334, %v1006
      %v1023 = vmul.f32 %v335, %v1007
      %v1024 = vmul.f32 %v336, %v1008
      %v1025 = vmul.f32 %v337, %v1009
      %v1026 = vmul.f32 %v338, %v1010
      %v1027 = vmul.f32 %v339, %v1011
      %v1028 = vmul.f32 %v340, %v1012
      %1029 = vst [vmem:[#allocation7] sm:$0xff] %v1013
      %1030 = vst [vmem:[#allocation7 + $0x8] sm:$0xff] %v1014
      %1031 = vst [vmem:[#allocation7 + $0x10] sm:$0xff] %v1015
      %1032 = vst [vmem:[#allocation7 + $0x18] sm:$0xff] %v1016
      %1033 = vst [vmem:[#allocation7 + $0x20] sm:$0xff] %v1017
      %1034 = vst [vmem:[#allocation7 + $0x28] sm:$0xff] %v1018
      %1035 = vst [vmem:[#allocation7 + $0x30] sm:$0xff] %v1019
      %1036 = vst [vmem:[#allocation7 + $0x38] sm:$0xff] %v1020
      %1037 = vst [vmem:[#allocation7 + $0x40] sm:$0xff] %v1021
      %1038 = vst [vmem:[#allocation7 + $0x48] sm:$0xff] %v1022
      %1039 = vst [vmem:[#allocation7 + $0x50] sm:$0xff] %v1023
      %1040 = vst [vmem:[#allocation7 + $0x58] sm:$0xff] %v1024
      %1041 = vst [vmem:[#allocation7 + $0x60] sm:$0xff] %v1025
      %1042 = vst [vmem:[#allocation7 + $0x68] sm:$0xff] %v1026
      %1043 = vst [vmem:[#allocation7 + $0x70] sm:$0xff] %v1027
      %1044 = vst [vmem:[#allocation7 + $0x78] sm:$0xff] %v1028
    $region25: #{tpu_custom_call.1} parent=1 // pred_fallthru
      _
    // Predicated region
    $region26: #{tpu_custom_call.1} parent=1 // pred_check
      _
    $region27: #{tpu_custom_call.1} parent=1 // pred_check_branch
      %1046 = sbr.rel (0) target = $region29
    $region28: #{tpu_custom_call.1} parent=1 // pred_region
      %1048 = vsyncadd [#allocation4], 0
      %s1049 = sshll.u32 [#allocation7], 4
      %s1050 = int_to_ptr.vmem [resolvable:$true] %s1049
      %s1051 = sshll.u32 %s2, 4
      %s1052 = int_to_ptr.hbm [resolvable:$true] %s1051
      %1057 = dma.vmem_to_hbm [thread:$0]  %s1050, 2048, %s1052, [#allocation4], 128, 128, 8
    $region29: #{tpu_custom_call.1} parent=1 // pred_fallthru
      _
    // Predicated region
    $region30: #{tpu_custom_call.1} parent=1 // pred_check
      _
    $region31: #{tpu_custom_call.1} parent=1 // pred_check_branch
      %1059 = sbr.rel (0) target = $region33
    $region32: #{tpu_custom_call.1} parent=1 // pred_region
      %1061 = dma.done [#allocation4], 2048
    $region33: #{tpu_custom_call.1} parent=1 // pred_fallthru
      _
    %1062 = vsyncpa [#allocation3], 1
    %1063 = vsyncpa [#allocation6], 1
    %1064 = vsyncpa [#allocation4], 1

</llo_original>
